<compile_context>
chip_gen: v7x
topology: tpu7x:2x2x1
jax: 0.10.0
libtpu: 0.0.40
codegen_flags: <defaults>
</compile_context>

<pallas_src>
import functools

import jax
import jax.numpy as jnp
from jax.experimental import pallas as pl
from jax.experimental.pallas import tpu as pltpu

NUM_HIDDEN_LAYERS = 3
LANE = 128


def _round_up(v, m):
    return ((v + m - 1) // m) * m


# --------------------------- packed-slab layout ------------------------------
def _layout(input_size, hidden_size, output_size, num_layers):
    I, H, L = input_size, hidden_size, num_layers
    lw = _round_up(max((L + 1) * H, output_size), LANE)   # lane width of slab
    r_wh = I                       # rows [r_wh, r_wh+L*H)   : h-side hidden weights (row-stacked)
    r_wo = I + L * H               # rows [r_wo, r_wo+H)     : output weights
    r_bh = r_wo + H                # row  r_bh               : hidden biases, lane-concatenated
    r_bo = r_bh + 1                # row  r_bo               : output bias
    p_rows = _round_up(r_bo + 1, 16)                       # bf16 sublane-pack friendly
    return lw, r_wh, r_wo, r_bh, r_bo, p_rows


# ----------------------------- Pallas kernel --------------------------------
def _mlp_kernel(x_ref, p_ref, o_ref, *, input_size, hidden_size, num_layers):
    I, H, L = input_size, hidden_size, num_layers
    r_wh = I
    r_wo = I + L * H
    r_bh = r_wo + H
    r_bo = r_bh + 1

    x = x_ref[...].astype(jnp.bfloat16)                               # (B, I)

    # One lane-dense matmul for ALL x-side contributions of all L+1 layers,
    # with the hidden biases folded in (each bias is consumed exactly once).
    xz = jnp.dot(x, p_ref[0:I, :], preferred_element_type=jnp.float32)  # (B, LW) f32
    xz = xz + p_ref[r_bh:r_bh + 1, :].astype(jnp.float32)

    # linear_in + ReLU: relu(x @ W_in + b_in)  == relu(xz[:, :H])
    h = jnp.maximum(xz[:, 0:H], 0.0)

    # dense hidden layers: relu(cat([h, x], 1) @ W_l + b_l)
    #                   == relu(h @ W_l[:H] + (x @ W_l[H:] + b_l))
    for l in range(L):
        wh_l = p_ref[r_wh + l * H: r_wh + (l + 1) * H, 0:H]           # (H, H) bf16
        z = jnp.dot(h.astype(jnp.bfloat16), wh_l,
                    preferred_element_type=jnp.float32)
        z = z + xz[:, (l + 1) * H:(l + 2) * H]
        h = jnp.maximum(z, 0.0)

    # linear_out (no activation) -> lane-dense (B, LW) unmasked store
    out = jnp.dot(h.astype(jnp.bfloat16), p_ref[r_wo:r_wo + H, :],
                  preferred_element_type=jnp.float32)
    out = out + p_ref[r_bo:r_bo + 1, :].astype(jnp.float32)
    o_ref[...] = out.astype(o_ref.dtype)


def mlp_forward(x, packed, *, input_size, hidden_size, output_size,
                num_layers=NUM_HIDDEN_LAYERS, block_b=256):
    """Whole dense-MLP forward in a single Pallas kernel invocation."""
    B, I = x.shape
    P, LW = packed.shape
    bb = B if B <= block_b else block_b          # batch tile (grid=1 for small B)
    grid = (pl.cdiv(B, bb),)

    kernel = functools.partial(_mlp_kernel, input_size=input_size,
                               hidden_size=hidden_size, num_layers=num_layers)
    out = pl.pallas_call(
        kernel,
        out_shape=jax.ShapeDtypeStruct((B, LW), jnp.float32),
        grid=grid,
        in_specs=[pl.BlockSpec((bb, I), lambda i: (i, 0)),
                  pl.BlockSpec((P, LW), lambda i: (0, 0))],
        out_specs=pl.BlockSpec((bb, LW), lambda i: (i, 0)),
        compiler_params=pltpu.CompilerParams(
            dimension_semantics=("parallel",)),   # lets v7x split large batches
    )(x, packed)
    return out[:, :output_size]


# --------------------------- parameter creation ------------------------------
def _init_linear(key, fan_in, fan_out):
    """PyTorch nn.Linear default init: U(-1/sqrt(fan_in), 1/sqrt(fan_in))."""
    kw, kb = jax.random.split(key)
    bound = 1.0 / float(fan_in) ** 0.5
    w = jax.random.uniform(kw, (fan_in, fan_out), jnp.float32, -bound, bound)
    b = jax.random.uniform(kb, (fan_out,), jnp.float32, -bound, bound)
    return w, b


def pack_params(w_in, b_in, hidden_ws, hidden_bs, w_out, b_out,
                input_size, hidden_size, output_size,
                num_layers=NUM_HIDDEN_LAYERS):
    """Pack every parameter into one lane-dense (P, 128) bf16 slab."""
    I, H, L = input_size, hidden_size, num_layers
    lw, r_wh, r_wo, r_bh, r_bo, p_rows = _layout(I, H, output_size, L)

    p = jnp.zeros((p_rows, lw), jnp.float32)
    # x-side slabs of all L+1 layers, lane-concatenated in rows [0, I)
    for l in range(L + 1):
        wx = w_in if l == 0 else hidden_ws[l - 1][H:, :]          # (I, H)
        p = p.at[0:I, l * H:(l + 1) * H].set(wx)
    # h-side slabs of the hidden layers, row-stacked
    for l in range(L):
        p = p.at[r_wh + l * H: r_wh + (l + 1) * H, 0:H].set(hidden_ws[l][:H, :])
    # output weights (zero-padded to full lane width)
    p = p.at[r_wo:r_wo + H, 0:output_size].set(w_out)
    # hidden biases lane-concatenated; output bias
    b_hid = jnp.concatenate([b_in] + list(hidden_bs))             # ((L+1)*H,)
    p = p.at[r_bh, 0:(L + 1) * H].set(b_hid)
    p = p.at[r_bo, 0:output_size].set(b_out)
    return p.astype(jnp.bfloat16)


def init_mlp(key, input_size, output_size, hidden_size,
             num_layers=NUM_HIDDEN_LAYERS):
    I, H = input_size, hidden_size
    keys = jax.random.split(key, 2 + num_layers)

    w_in, b_in = _init_linear(keys[0], I, H)
    hidden_ws, hidden_bs = [], []
    for i in range(num_layers):
        w, b = _init_linear(keys[1 + i], H + I, H)   # rows [:H]->h, [H:]->x
        hidden_ws.append(w)
        hidden_bs.append(b)
    w_out, b_out = _init_linear(keys[-1], H, output_size)

    packed = pack_params(w_in, b_in, hidden_ws, hidden_bs, w_out, b_out,
                         I, H, output_size, num_layers)
    return {
        "w_in": w_in, "b_in": b_in,
        "hidden_w": hidden_ws, "hidden_b": hidden_bs,
        "w_out": w_out, "b_out": b_out,
        "packed": packed,
    }


# ------------------------------- references ----------------------------------
def _mlp_ref_packed(x, packed, *, input_size, hidden_size, output_size,
                    num_layers=NUM_HIDDEN_LAYERS):
    """Pure-JAX mirror of the exact kernel math (bf16 operands, f32 accum)."""
    I, H, L = input_size, hidden_size, num_layers
    r_wh = I
    r_wo = I + L * H
    r_bh = r_wo + H
    r_bo = r_bh + 1
    xb = x.astype(jnp.bfloat16)
    xz = jnp.dot(xb, packed[0:I, :], preferred_element_type=jnp.float32)
    xz = xz + packed[r_bh:r_bh + 1, :].astype(jnp.float32)
    h = jnp.maximum(xz[:, 0:H], 0.0)
    for l in range(L):
        wh = packed[r_wh + l * H: r_wh + (l + 1) * H, 0:H]
        z = jnp.dot(h.astype(jnp.bfloat16), wh, preferred_element_type=jnp.float32)
        z = z + xz[:, (l + 1) * H:(l + 2) * H]
        h = jnp.maximum(z, 0.0)
    out = jnp.dot(h.astype(jnp.bfloat16), packed[r_wo:r_wo + H, :],
                  preferred_element_type=jnp.float32)
    out = out + packed[r_bo:r_bo + 1, :].astype(jnp.float32)
    return out[:, :output_size]


def _mlp_ref_f32(x, p, num_layers=NUM_HIDDEN_LAYERS):
    """Full-f32 reference mirroring the original PyTorch MLP.forward."""
    h = jnp.maximum(x @ p["w_in"] + p["b_in"], 0.0)
    for l in range(num_layers):
        a = jnp.concatenate([h, x], axis=1)
        h = jnp.maximum(a @ p["hidden_w"][l] + p["hidden_b"][l], 0.0)
    return h @ p["w_out"] + p["b_out"]


if __name__ == "__main__":
    input_size, output_size, hidden_size, batch = 16, 1, 32, 8

    key = jax.random.PRNGKey(0)
    k_x, k_params = jax.random.split(key)

    x = jax.random.normal(k_x, (batch, input_size), jnp.float32)
    params = init_mlp(k_params, input_size, output_size, hidden_size)

    y = mlp_forward(x, params["packed"], input_size=input_size,
                    hidden_size=hidden_size, output_size=output_size)
    y = jax.block_until_ready(y)
    assert y.shape == (batch, output_size)

    # tight check vs. a pure-JAX mirror of the exact kernel math (bf16 weights)
    y_mirror = _mlp_ref_packed(x, params["packed"], input_size=input_size,
                               hidden_size=hidden_size, output_size=output_size)
    assert jnp.allclose(y, y_mirror, atol=1e-3, rtol=1e-3)

    # looser check vs. the full-f32 PyTorch-semantics reference (bf16 rounding)
    y_f32 = _mlp_ref_f32(x, params)
    assert jnp.allclose(y, y_f32, atol=5e-2, rtol=5e-2)

    print("KERNEL_OK")
</pallas_src>

<mosaic_0001>
module attributes {stable_mosaic.version = 11 : i64} {
  func.func @_mlp_kernel(%arg0: i32, %arg1: memref<8x16xf32, #tpu.memory_space<vmem>>, %arg2: memref<160x128xbf16, #tpu.memory_space<vmem>>, %arg3: memref<8x128xf32, #tpu.memory_space<vmem>>) attributes {dimension_semantics = [#tpu.dimension_semantics<parallel>], iteration_bounds = array<i64: 1>, scalar_prefetch = 0 : i64, scratch_operands = 0 : i64, tpu.core_type = #tpu.core_type<tc>, window_params = [{transform_indices = @transform_0, window_bounds = array<i64: 8, 16>}, {pipeline_mode = #tpu.pipeline_mode<synchronous>, transform_indices = @transform_1, window_bounds = array<i64: 160, 128>}, {transform_indices = @transform_2, window_bounds = array<i64: 8, 128>}]} {
    %c0 = arith.constant 0 : index
    %c0_0 = arith.constant 0 : index
    %0 = vector.load %arg1[%c0, %c0_0] : memref<8x16xf32, #tpu.memory_space<vmem>>, vector<8x16xf32>
    %1 = arith.truncf %0 : vector<8x16xf32> to vector<8x16xbf16>
    %c0_1 = arith.constant 0 : index
    %c0_2 = arith.constant 0 : index
    %2 = vector.load %arg2[%c0_1, %c0_2] : memref<160x128xbf16, #tpu.memory_space<vmem>>, vector<16x128xbf16>
    %cst = arith.constant dense<0.000000e+00> : vector<8x128xf32>
    %3 = tpu.matmul %1, %2, %cst {dimension_numbers = #tpu.dot_dimension_numbers<[1], [0], [0], [1], [0, 0, 1, 1], [], []>} : vector<8x16xbf16>, vector<16x128xbf16>, vector<8x128xf32> -> vector<8x128xf32>
    %c144 = arith.constant 144 : index
    %c0_3 = arith.constant 0 : index
    %4 = vector.load %arg2[%c144, %c0_3] : memref<160x128xbf16, #tpu.memory_space<vmem>>, vector<1x128xbf16>
    %5 = arith.extf %4 : vector<1x128xbf16> to vector<1x128xf32>
    %6 = vector.broadcast %5 : vector<1x128xf32> to vector<8x128xf32>
    %7 = arith.addf %3, %6 : vector<8x128xf32>
    %8 = vector.extract_strided_slice %7 {offsets = [0, 0], sizes = [8, 32], strides = [1, 1]} : vector<8x128xf32> to vector<8x32xf32>
    %cst_4 = arith.constant 0.000000e+00 : f32
    %9 = vector.broadcast %cst_4 : f32 to vector<8x32xf32>
    %10 = arith.maximumf %8, %9 : vector<8x32xf32>
    %c16 = arith.constant 16 : index
    %c0_5 = arith.constant 0 : index
    %11 = vector.load %arg2[%c16, %c0_5] : memref<160x128xbf16, #tpu.memory_space<vmem>>, vector<32x32xbf16>
    %12 = arith.truncf %10 : vector<8x32xf32> to vector<8x32xbf16>
    %cst_6 = arith.constant dense<0.000000e+00> : vector<8x32xf32>
    %13 = tpu.matmul %12, %11, %cst_6 {dimension_numbers = #tpu.dot_dimension_numbers<[1], [0], [0], [1], [0, 0, 1, 1], [], []>} : vector<8x32xbf16>, vector<32x32xbf16>, vector<8x32xf32> -> vector<8x32xf32>
    %14 = vector.extract_strided_slice %7 {offsets = [0, 32], sizes = [8, 32], strides = [1, 1]} : vector<8x128xf32> to vector<8x32xf32>
    %15 = arith.addf %13, %14 : vector<8x32xf32>
    %cst_7 = arith.constant 0.000000e+00 : f32
    %16 = vector.broadcast %cst_7 : f32 to vector<8x32xf32>
    %17 = arith.maximumf %15, %16 : vector<8x32xf32>
    %c48 = arith.constant 48 : index
    %c0_8 = arith.constant 0 : index
    %18 = vector.load %arg2[%c48, %c0_8] : memref<160x128xbf16, #tpu.memory_space<vmem>>, vector<32x32xbf16>
    %19 = arith.truncf %17 : vector<8x32xf32> to vector<8x32xbf16>
    %cst_9 = arith.constant dense<0.000000e+00> : vector<8x32xf32>
    %20 = tpu.matmul %19, %18, %cst_9 {dimension_numbers = #tpu.dot_dimension_numbers<[1], [0], [0], [1], [0, 0, 1, 1], [], []>} : vector<8x32xbf16>, vector<32x32xbf16>, vector<8x32xf32> -> vector<8x32xf32>
    %21 = vector.extract_strided_slice %7 {offsets = [0, 64], sizes = [8, 32], strides = [1, 1]} : vector<8x128xf32> to vector<8x32xf32>
    %22 = arith.addf %20, %21 : vector<8x32xf32>
    %cst_10 = arith.constant 0.000000e+00 : f32
    %23 = vector.broadcast %cst_10 : f32 to vector<8x32xf32>
    %24 = arith.maximumf %22, %23 : vector<8x32xf32>
    %c80 = arith.constant 80 : index
    %c0_11 = arith.constant 0 : index
    %25 = vector.load %arg2[%c80, %c0_11] : memref<160x128xbf16, #tpu.memory_space<vmem>>, vector<32x32xbf16>
    %26 = arith.truncf %24 : vector<8x32xf32> to vector<8x32xbf16>
    %cst_12 = arith.constant dense<0.000000e+00> : vector<8x32xf32>
    %27 = tpu.matmul %26, %25, %cst_12 {dimension_numbers = #tpu.dot_dimension_numbers<[1], [0], [0], [1], [0, 0, 1, 1], [], []>} : vector<8x32xbf16>, vector<32x32xbf16>, vector<8x32xf32> -> vector<8x32xf32>
    %28 = vector.extract_strided_slice %7 {offsets = [0, 96], sizes = [8, 32], strides = [1, 1]} : vector<8x128xf32> to vector<8x32xf32>
    %29 = arith.addf %27, %28 : vector<8x32xf32>
    %cst_13 = arith.constant 0.000000e+00 : f32
    %30 = vector.broadcast %cst_13 : f32 to vector<8x32xf32>
    %31 = arith.maximumf %29, %30 : vector<8x32xf32>
    %32 = arith.truncf %31 : vector<8x32xf32> to vector<8x32xbf16>
    %c112 = arith.constant 112 : index
    %c0_14 = arith.constant 0 : index
    %33 = vector.load %arg2[%c112, %c0_14] : memref<160x128xbf16, #tpu.memory_space<vmem>>, vector<32x128xbf16>
    %cst_15 = arith.constant dense<0.000000e+00> : vector<8x128xf32>
    %34 = tpu.matmul %32, %33, %cst_15 {dimension_numbers = #tpu.dot_dimension_numbers<[1], [0], [0], [1], [0, 0, 1, 1], [], []>} : vector<8x32xbf16>, vector<32x128xbf16>, vector<8x128xf32> -> vector<8x128xf32>
    %c145 = arith.constant 145 : index
    %c0_16 = arith.constant 0 : index
    %35 = vector.load %arg2[%c145, %c0_16] : memref<160x128xbf16, #tpu.memory_space<vmem>>, vector<1x128xbf16>
    %36 = arith.extf %35 : vector<1x128xbf16> to vector<1x128xf32>
    %37 = vector.broadcast %36 : vector<1x128xf32> to vector<8x128xf32>
    %38 = arith.addf %34, %37 : vector<8x128xf32>
    %c0_17 = arith.constant 0 : index
    %c0_18 = arith.constant 0 : index
    %39 = vector.load %arg3[%c0_17, %c0_18] : memref<8x128xf32, #tpu.memory_space<vmem>>, vector<8x128xf32>
    tpu.vector_store %arg3[%c0_17, %c0_18], %38 {strides = array<i32>} : memref<8x128xf32, #tpu.memory_space<vmem>>, vector<8x128xf32>,
    return
  }
  func.func @transform_0(%arg0: i32) -> (i32, i32) {
    %c0_i32 = arith.constant 0 : i32
    %c0_i32_0 = arith.constant 0 : i32
    return %arg0, %c0_i32 : i32, i32
  }
  func.func @transform_1(%arg0: i32) -> (i32, i32) {
    %c0_i32 = arith.constant 0 : i32
    %c0_i32_0 = arith.constant 0 : i32
    %c0_i32_1 = arith.constant 0 : i32
    return %c0_i32, %c0_i32_0 : i32, i32
  }
  func.func @transform_2(%arg0: i32) -> (i32, i32) {
    %c0_i32 = arith.constant 0 : i32
    %c0_i32_0 = arith.constant 0 : i32
    return %arg0, %c0_i32 : i32, i32
  }
}

</mosaic_0001>

<llo_original>
// kernel: tpu_custom_call.1
$region0: #{tpu_custom_call.1}
  #allocation0 [shape = 'u32[]', space=smem, size = 0x4, offset = 0x4, fixed_abs, tag = 'smem constant byte address 0x4 - core index']
  #allocation1 [shape = 'u32[144,128]{1,0:T(1,128)}', space=vmem, size = 0x12000, scoped, tag = 'internal scratch']
  %s0 = inlined_call_operand.hbm [shape: f32[8,16], index: 0, kind: input, shape index: {}]
  %s1 = inlined_call_operand.hbm [shape: bf16[160,128], index: 1, kind: input, shape index: {}]
  %s2 = inlined_call_operand.hbm [shape: f32[8,128], index: 2, kind: output, shape index: {}]
  %s3 = sld [smem:[#allocation0]]
  $region26: #{tpu_custom_call.1} parent=0
    _
  %s5 = ssub.s32 1, %s3
  %s6 = scalar_select 0, %s5, %s3
  $region1: #{tpu_custom_call.1} parent=0
    #allocation2 [shape = 'u8[4096]{0}', space=vmem, size = 0x1000, scoped, tag = 'input window, operand 0, single buffered']
    #allocation3 [shape = 's32[1]{0}', space=sflag, size = 0x4, scoped, tag = 'scoped memory for tpu_custom_call.1']
    #allocation4 [shape = 's32[1]{0}', space=sflag, size = 0x4, scoped, tag = 'scoped memory for tpu_custom_call.1']
    #allocation5 [shape = 'u8[40960]{0}', space=vmem, size = 0xa000, scoped, tag = 'input window, operand 1, single buffered']
    #allocation6 [shape = 's32[1]{0}', space=sflag, size = 0x4, scoped, tag = 'scoped memory for tpu_custom_call.1']
    #allocation7 [shape = 'u8[4096]{0}', space=vmem, size = 0x1000, scoped, tag = 'output window, operand 0, single buffered']
    %7 = vsyncpa [#allocation3], 0
    %8 = vsyncpa [#allocation6], 0
    %9 = vsyncpa [#allocation4], 0
    // Predicated region
    $region2: #{tpu_custom_call.1} parent=1 // pred_check
      _
    $region3: #{tpu_custom_call.1} parent=1 // pred_check_branch
      %11 = sbr.rel (0) target = $region5
    $region4: #{tpu_custom_call.1} parent=1 // pred_region
      %s13 = ssub.s32 128, 128
      %14 = vsyncadd [#allocation3], %s13
      %s16 = sshll.u32 [#allocation2], 4
      %s17 = int_to_ptr.vmem [resolvable:$true] %s16
      %19 = dma.hbm_to_vmem [thread:$0]  %s0, 128, %s17, [#allocation3]
    $region5: #{tpu_custom_call.1} parent=1 // pred_fallthru
      _
    // Predicated region
    $region6: #{tpu_custom_call.1} parent=1 // pred_check
      _
    $region7: #{tpu_custom_call.1} parent=1 // pred_check_branch
      %21 = sbr.rel (0) target = $region9
    $region8: #{tpu_custom_call.1} parent=1 // pred_region
      %s23 = ssub.s32 1280, 1280
      %24 = vsyncadd [#allocation6], %s23
      %s25 = sshll.u32 [#allocation5], 4
      %s26 = int_to_ptr.vmem [resolvable:$true] %s25
      %31 = dma.hbm_to_vmem [thread:$0]  %s1, 1280, %s26, [#allocation6], 64, 64, 4
    $region9: #{tpu_custom_call.1} parent=1 // pred_fallthru
      _
    // Predicated region
    $region10: #{tpu_custom_call.1} parent=1 // pred_check
      _
    $region11: #{tpu_custom_call.1} parent=1 // pred_check_branch
      %33 = sbr.rel (0) target = $region13
    $region12: #{tpu_custom_call.1} parent=1 // pred_region
      %34 = dma.done [#allocation3], 128
    $region13: #{tpu_custom_call.1} parent=1 // pred_fallthru
      _
    // Predicated region
    $region14: #{tpu_custom_call.1} parent=1 // pred_check
      _
    $region15: #{tpu_custom_call.1} parent=1 // pred_check_branch
      %36 = sbr.rel (0) target = $region17
    $region16: #{tpu_custom_call.1} parent=1 // pred_region
      %37 = dma.done [#allocation6], 1280
    $region17: #{tpu_custom_call.1} parent=1 // pred_fallthru
      _
    %v39 = vld [vmem:[#allocation2] sm:$0xff]
    %v40 = vpack.c.bf16 %v39, %v39
    %v41 = vld [vmem:[#allocation5] sm:$0xf]
    %v42 = vld [vmem:[#allocation5 + $0x4] sm:$0xf]
    %v43 = vld [vmem:[#allocation5 + $0x48] sm:$0x1]
    %v44 = vunpack.c.l.bf16 %v43
    %v45 = vlaneseq
    %v46 = vshrl.u32 %v45, 7
    %v47 = vsub.s32 0, %v46
    %v48 = vrot.slane %v44, %v47
    %v51 = vunpack.c.l.b16 %v41
    %v52 = vunpack.c.l.b16 %v42
    %v53 = vpack.c.b16 %v52, %v51
    %vm55 = vcmask 130048
    %v57 = vsel %vm55, %v40, 0
    %59 = vmatprep.subr.bf16.mxu0 0
    %60 = vmatpush1.bf16.msra.mxu0 %v53
    %61 = vmatprep.subr.bf16.mxu0 0
    %62 = vmatpush1.bf16.msra.mxu0 0
    %63 = vmatprep.subr.bf16.mxu0 0
    %64 = vmatpush1.bf16.msra.mxu0 0
    %65 = vmatprep.subr.bf16.mxu0 0
    %66 = vmatpush1.bf16.msra.mxu0 0
    %67 = vmatprep.subr.bf16.mxu0 0
    %68 = vmatpush1.bf16.msra.mxu0 0
    %69 = vmatprep.subr.bf16.mxu0 0
    %70 = vmatpush1.bf16.msra.mxu0 0
    %71 = vmatprep.subr.bf16.mxu0 0
    %72 = vmatpush1.bf16.msra.mxu0 0
    %73 = vmatprep.subr.bf16.mxu0 0
    %74 = vmatpush1.bf16.msra.mxu0 0
    %75 = vmatprep.subr.bf16.mxu0 0
    %76 = vmatpush1.bf16.msra.mxu0 0
    %77 = vmatprep.subr.bf16.mxu0 0
    %78 = vmatpush1.bf16.msra.mxu0 0
    %79 = vmatprep.subr.bf16.mxu0 0
    %80 = vmatpush1.bf16.msra.mxu0 0
    %81 = vmatprep.subr.bf16.mxu0 0
    %82 = vmatpush1.bf16.msra.mxu0 0
    %83 = vmatprep.subr.bf16.mxu0 0
    %84 = vmatpush1.bf16.msra.mxu0 0
    %85 = vmatprep.subr.bf16.mxu0 0
    %86 = vmatpush1.bf16.msra.mxu0 0
    %87 = vmatprep.subr.bf16.mxu0 0
    %88 = vmatpush1.bf16.msra.mxu0 0
    %89 = vmatprep.subr.bf16.mxu0 0
    %90 = vmatpush1.bf16.msra.mxu0 0
    %91 = vmatprep.mubr.bf16.mxu0 0
    %92 = vmatmul.mubr.bf16.gmra.mrb[0].mxu0 %v57
    %v93 = vpop.f32.mrb[0].mxu0
    %v94 = vadd.f32 %v48, %v93
    %v95 = vpop.f32.mrb[0].mxu0
    %v96 = vpop.f32.mrb[0].mxu0
    %v97 = vpop.f32.mrb[0].mxu0
    %98 = vdwg.mxu0
    %v99 = vmax.f32 %v94, 0.0
    %v100 = vld [vmem:[#allocation5 + $0x8] sm:$0xf]
    %v101 = vld [vmem:[#allocation5 + $0xc] sm:$0xf]
    %v102 = vld [vmem:[#allocation5 + $0x10] sm:$0xf]
    %v103 = vld [vmem:[#allocation5 + $0x14] sm:$0xf]
    %v104 = vpack.c.bf16 %v99, %v99
    %v109 = vunpack.c.l.b16 %v100
    %v110 = vunpack.c.l.b16 %v101
    %v111 = vunpack.c.l.b16 %v102
    %v112 = vunpack.c.l.b16 %v103
    %v113 = vpack.c.b16 %v110, %v109
    %v114 = vpack.c.b16 %v112, %v111
    %118 = vrot.lane.b32.xlu0 %v94, 96
    %v119 = vpop.permute.xlu0 %118
    %vm121 = vcmask 261120
    %v123 = vsel %vm121, %v104, 0
    %125 = vmatprep.subr.bf16.mxu0 0
    %126 = vmatpush1.bf16.msra.mxu0 %v113
    %127 = vmatprep.subr.bf16.mxu0 0
    %128 = vmatpush1.bf16.msra.mxu0 %v114
    %129 = vmatprep.subr.bf16.mxu0 0
    %130 = vmatpush1.bf16.msra.mxu0 0
    %131 = vmatprep.subr.bf16.mxu0 0
    %132 = vmatpush1.bf16.msra.mxu0 0
    %133 = vmatprep.subr.bf16.mxu0 0
    %134 = vmatpush1.bf16.msra.mxu0 0
    %135 = vmatprep.subr.bf16.mxu0 0
    %136 = vmatpush1.bf16.msra.mxu0 0
    %137 = vmatprep.subr.bf16.mxu0 0
    %138 = vmatpush1.bf16.msra.mxu0 0
    %139 = vmatprep.subr.bf16.mxu0 0
    %140 = vmatpush1.bf16.msra.mxu0 0
    %141 = vmatprep.subr.bf16.mxu0 0
    %142 = vmatpush1.bf16.msra.mxu0 0
    %143 = vmatprep.subr.bf16.mxu0 0
    %144 = vmatpush1.bf16.msra.mxu0 0
    %145 = vmatprep.subr.bf16.mxu0 0
    %146 = vmatpush1.bf16.msra.mxu0 0
    %147 = vmatprep.subr.bf16.mxu0 0
    %148 = vmatpush1.bf16.msra.mxu0 0
    %149 = vmatprep.subr.bf16.mxu0 0
    %150 = vmatpush1.bf16.msra.mxu0 0
    %151 = vmatprep.subr.bf16.mxu0 0
    %152 = vmatpush1.bf16.msra.mxu0 0
    %153 = vmatprep.subr.bf16.mxu0 0
    %154 = vmatpush1.bf16.msra.mxu0 0
    %155 = vmatprep.subr.bf16.mxu0 0
    %156 = vmatpush1.bf16.msra.mxu0 0
    %157 = vmatprep.mubr.bf16.mxu0 0
    %158 = vmatmul.mubr.bf16.gmra.mrb[0].mxu0 %v123
    %v159 = vpop.f32.mrb[0].mxu0
    %v160 = vadd.f32 %v119, %v159
    %v161 = vpop.f32.mrb[0].mxu0
    %v162 = vpop.f32.mrb[0].mxu0
    %v163 = vpop.f32.mrb[0].mxu0
    %164 = vdwg.mxu0
    %v165 = vmax.f32 %v160, 0.0
    %v166 = vld [vmem:[#allocation5 + $0x18] sm:$0xf]
    %v167 = vld [vmem:[#allocation5 + $0x1c] sm:$0xf]
    %v168 = vld [vmem:[#allocation5 + $0x20] sm:$0xf]
    %v169 = vld [vmem:[#allocation5 + $0x24] sm:$0xf]
    %v170 = vpack.c.bf16 %v165, %v165
    %v175 = vunpack.c.l.b16 %v166
    %v176 = vunpack.c.l.b16 %v167
    %v177 = vunpack.c.l.b16 %v168
    %v178 = vunpack.c.l.b16 %v169
    %v179 = vpack.c.b16 %v176, %v175
    %v180 = vpack.c.b16 %v178, %v177
    %183 = vrot.lane.b32.xlu0 %v94, 64
    %v184 = vpop.permute.xlu0 %183
    %v187 = vsel %vm121, %v170, 0
    %189 = vmatprep.subr.bf16.mxu0 0
    %190 = vmatpush1.bf16.msra.mxu0 %v179
    %191 = vmatprep.subr.bf16.mxu0 0
    %192 = vmatpush1.bf16.msra.mxu0 %v180
    %193 = vmatprep.subr.bf16.mxu0 0
    %194 = vmatpush1.bf16.msra.mxu0 0
    %195 = vmatprep.subr.bf16.mxu0 0
    %196 = vmatpush1.bf16.msra.mxu0 0
    %197 = vmatprep.subr.bf16.mxu0 0
    %198 = vmatpush1.bf16.msra.mxu0 0
    %199 = vmatprep.subr.bf16.mxu0 0
    %200 = vmatpush1.bf16.msra.mxu0 0
    %201 = vmatprep.subr.bf16.mxu0 0
    %202 = vmatpush1.bf16.msra.mxu0 0
    %203 = vmatprep.subr.bf16.mxu0 0
    %204 = vmatpush1.bf16.msra.mxu0 0
    %205 = vmatprep.subr.bf16.mxu0 0
    %206 = vmatpush1.bf16.msra.mxu0 0
    %207 = vmatprep.subr.bf16.mxu0 0
    %208 = vmatpush1.bf16.msra.mxu0 0
    %209 = vmatprep.subr.bf16.mxu0 0
    %210 = vmatpush1.bf16.msra.mxu0 0
    %211 = vmatprep.subr.bf16.mxu0 0
    %212 = vmatpush1.bf16.msra.mxu0 0
    %213 = vmatprep.subr.bf16.mxu0 0
    %214 = vmatpush1.bf16.msra.mxu0 0
    %215 = vmatprep.subr.bf16.mxu0 0
    %216 = vmatpush1.bf16.msra.mxu0 0
    %217 = vmatprep.subr.bf16.mxu0 0
    %218 = vmatpush1.bf16.msra.mxu0 0
    %219 = vmatprep.subr.bf16.mxu0 0
    %220 = vmatpush1.bf16.msra.mxu0 0
    %221 = vmatprep.mubr.bf16.mxu0 0
    %222 = vmatmul.mubr.bf16.gmra.mrb[0].mxu0 %v187
    %v223 = vpop.f32.mrb[0].mxu0
    %v224 = vadd.f32 %v184, %v223
    %v225 = vpop.f32.mrb[0].mxu0
    %v226 = vpop.f32.mrb[0].mxu0
    %v227 = vpop.f32.mrb[0].mxu0
    %228 = vdwg.mxu0
    %v229 = vmax.f32 %v224, 0.0
    %v230 = vld [vmem:[#allocation5 + $0x28] sm:$0xf]
    %v231 = vld [vmem:[#allocation5 + $0x2c] sm:$0xf]
    %v232 = vld [vmem:[#allocation5 + $0x30] sm:$0xf]
    %v233 = vld [vmem:[#allocation5 + $0x34] sm:$0xf]
    %v234 = vpack.c.bf16 %v229, %v229
    %v239 = vunpack.c.l.b16 %v230
    %v240 = vunpack.c.l.b16 %v231
    %v241 = vunpack.c.l.b16 %v232
    %v242 = vunpack.c.l.b16 %v233
    %v243 = vpack.c.b16 %v240, %v239
    %v244 = vpack.c.b16 %v242, %v241
    %247 = vrot.lane.b32.xlu0 %v94, 32
    %v248 = vpop.permute.xlu0 %247
    %v251 = vsel %vm121, %v234, 0
    %253 = vmatprep.subr.bf16.mxu0 0
    %254 = vmatpush1.bf16.msra.mxu0 %v243
    %255 = vmatprep.subr.bf16.mxu0 0
    %256 = vmatpush1.bf16.msra.mxu0 %v244
    %257 = vmatprep.subr.bf16.mxu0 0
    %258 = vmatpush1.bf16.msra.mxu0 0
    %259 = vmatprep.subr.bf16.mxu0 0
    %260 = vmatpush1.bf16.msra.mxu0 0
    %261 = vmatprep.subr.bf16.mxu0 0
    %262 = vmatpush1.bf16.msra.mxu0 0
    %263 = vmatprep.subr.bf16.mxu0 0
    %264 = vmatpush1.bf16.msra.mxu0 0
    %265 = vmatprep.subr.bf16.mxu0 0
    %266 = vmatpush1.bf16.msra.mxu0 0
    %267 = vmatprep.subr.bf16.mxu0 0
    %268 = vmatpush1.bf16.msra.mxu0 0
    %269 = vmatprep.subr.bf16.mxu0 0
    %270 = vmatpush1.bf16.msra.mxu0 0
    %271 = vmatprep.subr.bf16.mxu0 0
    %272 = vmatpush1.bf16.msra.mxu0 0
    %273 = vmatprep.subr.bf16.mxu0 0
    %274 = vmatpush1.bf16.msra.mxu0 0
    %275 = vmatprep.subr.bf16.mxu0 0
    %276 = vmatpush1.bf16.msra.mxu0 0
    %277 = vmatprep.subr.bf16.mxu0 0
    %278 = vmatpush1.bf16.msra.mxu0 0
    %279 = vmatprep.subr.bf16.mxu0 0
    %280 = vmatpush1.bf16.msra.mxu0 0
    %281 = vmatprep.subr.bf16.mxu0 0
    %282 = vmatpush1.bf16.msra.mxu0 0
    %283 = vmatprep.subr.bf16.mxu0 0
    %284 = vmatpush1.bf16.msra.mxu0 0
    %285 = vmatprep.mubr.bf16.mxu0 0
    %286 = vmatmul.mubr.bf16.gmra.mrb[0].mxu0 %v251
    %v287 = vpop.f32.mrb[0].mxu0
    %v288 = vadd.f32 %v248, %v287
    %v289 = vpop.f32.mrb[0].mxu0
    %v290 = vpop.f32.mrb[0].mxu0
    %v291 = vpop.f32.mrb[0].mxu0
    %292 = vdwg.mxu0
    %v293 = vmax.f32 %v288, 0.0
    %v294 = vpack.c.bf16 %v293, %v293
    %v295 = vld [vmem:[#allocation5 + $0x38] sm:$0xf]
    %v296 = vld [vmem:[#allocation5 + $0x3c] sm:$0xf]
    %v297 = vld [vmem:[#allocation5 + $0x40] sm:$0xf]
    %v298 = vld [vmem:[#allocation5 + $0x44] sm:$0xf]
    %v299 = vlaneseq
    %v300 = vshrl.u32 %v299, 7
    %v301 = vsub.s32 1, %v300
    %v302 = vrot.slane %v44, %v301
    %v307 = vunpack.c.l.b16 %v295
    %v308 = vunpack.c.l.b16 %v296
    %v309 = vunpack.c.l.b16 %v297
    %v310 = vunpack.c.l.b16 %v298
    %v311 = vpack.c.b16 %v308, %v307
    %v312 = vpack.c.b16 %v310, %v309
    %v316 = vsel %vm121, %v294, 0
    %318 = vmatprep.subr.bf16.mxu0 0
    %319 = vmatpush1.bf16.msra.mxu0 %v311
    %320 = vmatprep.subr.bf16.mxu0 0
    %321 = vmatpush1.bf16.msra.mxu0 %v312
    %322 = vmatprep.subr.bf16.mxu0 0
    %323 = vmatpush1.bf16.msra.mxu0 0
    %324 = vmatprep.subr.bf16.mxu0 0
    %325 = vmatpush1.bf16.msra.mxu0 0
    %326 = vmatprep.subr.bf16.mxu0 0
    %327 = vmatpush1.bf16.msra.mxu0 0
    %328 = vmatprep.subr.bf16.mxu0 0
    %329 = vmatpush1.bf16.msra.mxu0 0
    %330 = vmatprep.subr.bf16.mxu0 0
    %331 = vmatpush1.bf16.msra.mxu0 0
    %332 = vmatprep.subr.bf16.mxu0 0
    %333 = vmatpush1.bf16.msra.mxu0 0
    %334 = vmatprep.subr.bf16.mxu0 0
    %335 = vmatpush1.bf16.msra.mxu0 0
    %336 = vmatprep.subr.bf16.mxu0 0
    %337 = vmatpush1.bf16.msra.mxu0 0
    %338 = vmatprep.subr.bf16.mxu0 0
    %339 = vmatpush1.bf16.msra.mxu0 0
    %340 = vmatprep.subr.bf16.mxu0 0
    %341 = vmatpush1.bf16.msra.mxu0 0
    %342 = vmatprep.subr.bf16.mxu0 0
    %343 = vmatpush1.bf16.msra.mxu0 0
    %344 = vmatprep.subr.bf16.mxu0 0
    %345 = vmatpush1.bf16.msra.mxu0 0
    %346 = vmatprep.subr.bf16.mxu0 0
    %347 = vmatpush1.bf16.msra.mxu0 0
    %348 = vmatprep.subr.bf16.mxu0 0
    %349 = vmatpush1.bf16.msra.mxu0 0
    %350 = vmatprep.mubr.bf16.mxu0 0
    %351 = vmatmul.mubr.bf16.gmra.mrb[0].mxu0 %v316
    %v352 = vpop.f32.mrb[0].mxu0
    %v353 = vadd.f32 %v302, %v352
    %v354 = vpop.f32.mrb[0].mxu0
    %v355 = vpop.f32.mrb[0].mxu0
    %v356 = vpop.f32.mrb[0].mxu0
    %357 = vdwg.mxu0
    %358 = vst [vmem:[#allocation7] sm:$0xff] %v353
    // Predicated region
    $region18: #{tpu_custom_call.1} parent=1 // pred_check
      _
    $region19: #{tpu_custom_call.1} parent=1 // pred_check_branch
      %360 = sbr.rel (0) target = $region21
    $region20: #{tpu_custom_call.1} parent=1 // pred_region
      %s362 = ssub.s32 128, 128
      %363 = vsyncadd [#allocation4], %s362
      %s365 = sshll.u32 [#allocation7], 4
      %s366 = int_to_ptr.vmem [resolvable:$true] %s365
      %368 = dma.vmem_to_hbm [thread:$0]  %s366, 128, %s2, [#allocation4]
    $region21: #{tpu_custom_call.1} parent=1 // pred_fallthru
      _
    // Predicated region
    $region22: #{tpu_custom_call.1} parent=1 // pred_check
      _
    $region23: #{tpu_custom_call.1} parent=1 // pred_check_branch
      %370 = sbr.rel (0) target = $region25
    $region24: #{tpu_custom_call.1} parent=1 // pred_region
      %371 = dma.done [#allocation4], 128
    $region25: #{tpu_custom_call.1} parent=1 // pred_fallthru
      _
    %372 = vsyncpa [#allocation3], 1
    %373 = vsyncpa [#allocation6], 1
    %374 = vsyncpa [#allocation4], 1

</llo_original>
